<compile_context>
chip_gen: v6e
topology: v6e:2x2x1
jax: 0.10.0
libtpu: 0.0.40
codegen_flags: <defaults>
</compile_context>

<pallas_src>
import functools

import jax
import jax.numpy as jnp
from jax import lax
from jax.experimental import pallas as pl
from jax.experimental.pallas import tpu as pltpu


def _round_up(x, m):
    return ((x + m - 1) // m) * m


# Full-tile f32/i32 temporaries the kernel body materializes per logits
# element (shifted tile, iota/one-hot, weight/select product, exp input).
# Used to budget VMEM honestly, not just the double-buffered input.
_F32_TEMPS_PER_ELEM = 4


def _tpu_config():
    """Per-generation tiling knobs, gated on VMEM capacity as a chip proxy."""
    try:
        info = pltpu.get_tpu_info()
        vmem_cap = int(getattr(info, "vmem_capacity_bytes", 128 << 20))
    except Exception:  # interpret mode / CPU tracing / older jax
        vmem_cap = 128 << 20
    small_vmem = vmem_cap <= (64 << 20)  # v7x-class: 64 MiB per TC, 2 TCs/chip
    return {
        # Hard cap handed to Mosaic; leaves headroom below physical VMEM.
        "vmem_budget": (40 << 20) if small_vmem else (96 << 20),
        # Native-dtype HBM bytes per logits tile (amortizes ~0.35us/step).
        "target_tile_bytes": (3 << 20) if small_vmem else (6 << 20),
        # Switch to the vocab-split online-logsumexp kernel above this row size.
        "vocab_split_bytes": (256 << 10) if small_vmem else (512 << 10),
        # Only shrink row tiles for cross-core balance on megacore (v7x) parts.
        "megacore": small_vmem,
    }


def _choose_rows(n_rows, per_row_stream, per_row_work, sublane, cfg):
    """Pick block_rows from the HBM-streaming target and the VMEM working set."""
    rows_tgt = cfg["target_tile_bytes"] // max(1, per_row_stream)
    rows_vmem = (cfg["vmem_budget"] - (4 << 20)) // max(1, per_row_work)
    rows = max(sublane, min(rows_tgt, rows_vmem))
    if cfg["megacore"] and n_rows > sublane:
        # Keep >= 2 row blocks so both TensorCores of a v7x chip get work.
        rows = min(rows, _round_up(pl.cdiv(n_rows, 2), sublane))
    # Never exceed the largest sublane-multiple <= n_rows (ragged last block
    # on the row axis is handled by Pallas; blocks bigger than the array are
    # avoided on purpose).
    rows = min(rows, (n_rows // sublane) * sublane)
    if rows >= 128:
        rows = (rows // 128) * 128
    else:
        rows = _round_up(rows, sublane)
    return max(sublane, int(rows))


# --------------------------------------------------------------------------
# Kernel 1: whole-row tiles (one logsumexp sweep per row block).
# --------------------------------------------------------------------------
def _xent_rowwise_kernel(logits_ref, labels_ref, loss_ref, *,
                         smoothing, ignore_index, vocab):
    x = logits_ref[...]                                    # (TM, V) native dtype
    lbl = labels_ref[...]                                  # (TM, 1) int32

    # Row max in the native dtype (exact for bf16); `xm` is the only full-tile
    # f32 temp and it feeds the exp path.
    m32 = jnp.max(x, axis=-1, keepdims=True).astype(jnp.float32)
    xm = x.astype(jnp.float32) - m32                       # (TM, V) f32

    # exp feeds the reduce directly (no named full-tile `ex`).
    lse = m32 + jnp.log(jnp.sum(jnp.exp(xm), axis=-1, keepdims=True))

    onehot = lax.broadcasted_iota(jnp.int32, x.shape, 1) == lbl

    if smoothing > 0.0:
        # Fused pick + smoothing:  loss = lse - sum(w*x), sum(w) == 1, so
        # sum(w*x) = sum(w*xm) + m.
        hi = jnp.float32(1.0 - smoothing + smoothing / vocab)
        lo = jnp.float32(smoothing / vocab)
        wsum = jnp.sum(jnp.where(onehot, hi, lo) * xm,
                       axis=-1, keepdims=True) + m32
    else:
        # One-hot pick on the native-dtype tile (exact: one element survives).
        wsum = jnp.sum(jnp.where(onehot, x, jnp.zeros_like(x)),
                       axis=-1, keepdims=True).astype(jnp.float32)

    loss = lse - wsum
    loss_ref[...] = jnp.where(lbl == ignore_index, 0.0, loss)


# --------------------------------------------------------------------------
# Kernel 2: vocab-split tiles with online logsumexp (for very large V).
# --------------------------------------------------------------------------
def _xent_vsplit_kernel(logits_ref, labels_ref, loss_ref, m_sc, l_sc, w_sc, *,
                        smoothing, ignore_index, vocab, vocab_block, needs_mask):
    k = pl.program_id(1)

    @pl.when(k == 0)
    def _():
        m_sc[...] = jnp.full(m_sc.shape, -jnp.inf, dtype=m_sc.dtype)
        l_sc[...] = jnp.zeros(l_sc.shape, dtype=l_sc.dtype)
        w_sc[...] = jnp.zeros(w_sc.shape, dtype=w_sc.dtype)

    lbl = labels_ref[...]                                  # (TM, 1) int32
    x32 = logits_ref[...].astype(jnp.float32)              # (TM, TV) f32
    col = vocab_block * k + lax.broadcasted_iota(jnp.int32, x32.shape, 1)

    if needs_mask:
        valid = col < vocab
        x_lse = jnp.where(valid, x32, -jnp.inf)
    else:
        x_lse = x32

    # Online logsumexp over the vocab chunks.
    m_prev = m_sc[...]
    m_new = jnp.maximum(m_prev, jnp.max(x_lse, axis=-1, keepdims=True))
    l_sc[...] = (jnp.exp(m_prev - m_new) * l_sc[...]
                 + jnp.sum(jnp.exp(x_lse - m_new), axis=-1, keepdims=True))
    m_sc[...] = m_new

    # Fused pick + label-smoothing running weighted sum (no shift needed).
    onehot = col == lbl
    if smoothing > 0.0:
        hi = jnp.float32(1.0 - smoothing + smoothing / vocab)
        lo = jnp.float32(smoothing / vocab)
        contrib = jnp.where(onehot, hi, lo) * x32
    else:
        contrib = jnp.where(onehot, x32, 0.0)
    if needs_mask:
        contrib = jnp.where(valid, contrib, 0.0)
    w_sc[...] += jnp.sum(contrib, axis=-1, keepdims=True)

    @pl.when(k == pl.num_programs(1) - 1)
    def _():
        loss = m_sc[...] + jnp.log(l_sc[...]) - w_sc[...]
        loss_ref[...] = jnp.where(lbl == ignore_index, 0.0, loss)


# --------------------------------------------------------------------------
# Wrapper
# --------------------------------------------------------------------------
def cross_entropy_apex(logits, labels, *, ignore_index=-100, reduction="mean",
                       label_smoothing=0.0, block_rows=None, vocab_block=None,
                       target_tile_bytes=None):
    """Forward of CrossEntropyLossApex.

    logits: [N, V] float (consumed in its native dtype), labels: [N] int.
    """
    if reduction not in ("mean", "none"):
        raise NotImplementedError("Only support reduction = 'mean' or 'none'")

    N, V = logits.shape
    dbytes = jnp.dtype(logits.dtype).itemsize
    sublane = {4: 8, 2: 16, 1: 32}.get(dbytes, 8)

    cfg = dict(_tpu_config())
    if target_tile_bytes is not None:
        cfg["target_tile_bytes"] = int(target_tile_bytes)

    labels = labels.astype(jnp.int32)
    labels2d = labels.reshape(N, 1)

    # Tiny-N safety: pad up to one sublane group (padded rows ignored).
    logits_in = logits
    n_padded = N
    if N < sublane:
        pad = sublane - N
        logits_in = jnp.pad(logits, ((0, pad), (0, 0)))
        labels2d = jnp.pad(labels2d, ((0, pad), (0, 0)),
                           constant_values=int(ignore_index))
        n_padded = sublane

    row_stream = V * dbytes
    use_vsplit = (vocab_block is not None) or (row_stream > cfg["vocab_split_bytes"])

    tv = None
    if use_vsplit:
        tv = vocab_block
        if tv is None:
            # Largest power-of-two multiple of 128 dividing V (capped at 2048);
            # otherwise 2048 with in-kernel lane masking.
            tv = 128
            while tv < 2048 and V % (tv * 2) == 0:
                tv *= 2
            if V % tv != 0:
                tv = 2048
        tv = int(tv)
        if tv % 128 != 0 and tv != V:
            tv = _round_up(tv, 128)
        if tv >= V:
            use_vsplit = False   # a single chunk covers the row: use row-wise

    if use_vsplit:
        needs_mask = (V % tv) != 0
        n_vblocks = pl.cdiv(V, tv)
        per_row_work = 2 * tv * dbytes + _F32_TEMPS_PER_ELEM * tv * 4 + 16
        if block_rows is None:
            block_rows = _choose_rows(n_padded, tv * dbytes, per_row_work,
                                      sublane, cfg)
        vmem_limit = int(min(cfg["vmem_budget"],
                             max(24 << 20, block_rows * per_row_work + (6 << 20))))
        kernel = functools.partial(
            _xent_vsplit_kernel,
            smoothing=float(label_smoothing), ignore_index=int(ignore_index),
            vocab=V, vocab_block=tv, needs_mask=needs_mask)
        losses = pl.pallas_call(
            kernel,
            out_shape=jax.ShapeDtypeStruct((n_padded, 1), jnp.float32),
            grid_spec=pltpu.PrefetchScalarGridSpec(
                num_scalar_prefetch=0,
                grid=(pl.cdiv(n_padded, block_rows), n_vblocks),
                in_specs=[
                    pl.BlockSpec((block_rows, tv), lambda i, k: (i, k)),
                    pl.BlockSpec((block_rows, 1), lambda i, k: (i, 0)),
                ],
                out_specs=pl.BlockSpec((block_rows, 1), lambda i, k: (i, 0)),
                scratch_shapes=[pltpu.VMEM((block_rows, 1), jnp.float32)] * 3,
            ),
            compiler_params=pltpu.CompilerParams(
                dimension_semantics=("parallel", "arbitrary"),
                vmem_limit_bytes=vmem_limit,
            ),
        )(logits_in, labels2d)
    else:
        per_row_work = 2 * row_stream + _F32_TEMPS_PER_ELEM * V * 4
        if block_rows is None:
            block_rows = _choose_rows(n_padded, row_stream, per_row_work,
                                      sublane, cfg)
        vmem_limit = int(min(cfg["vmem_budget"],
                             max(24 << 20, block_rows * per_row_work + (6 << 20))))
        kernel = functools.partial(
            _xent_rowwise_kernel,
            smoothing=float(label_smoothing), ignore_index=int(ignore_index),
            vocab=V)
        losses = pl.pallas_call(
            kernel,
            out_shape=jax.ShapeDtypeStruct((n_padded, 1), jnp.float32),
            grid_spec=pltpu.PrefetchScalarGridSpec(
                num_scalar_prefetch=0,
                grid=(pl.cdiv(n_padded, block_rows),),
                in_specs=[
                    pl.BlockSpec((block_rows, V), lambda i: (i, 0)),
                    pl.BlockSpec((block_rows, 1), lambda i: (i, 0)),
                ],
                out_specs=pl.BlockSpec((block_rows, 1), lambda i: (i, 0)),
            ),
            compiler_params=pltpu.CompilerParams(
                dimension_semantics=("parallel",),
                vmem_limit_bytes=vmem_limit,
            ),
        )(logits_in, labels2d)

    losses = losses[:N, 0]
    if reduction == "mean":
        # Matches the module: loss.sum() / (target != ignore_index).sum().
        # (NaN/Inf if every label is ignored, same as the PyTorch reference.)
        denom = jnp.sum((labels != ignore_index).astype(jnp.float32))
        return jnp.sum(losses) / denom
    return losses


def _reference(logits, labels, ignore_index, smoothing, reduction):
    x = logits.astype(jnp.float32)
    N, V = x.shape
    lse = jax.nn.logsumexp(x, axis=-1)
    picked = jnp.take_along_axis(
        x, jnp.clip(labels, 0, V - 1).reshape(N, 1), axis=-1).reshape(N)
    if smoothing > 0.0:
        loss = lse - (1.0 - smoothing) * picked - smoothing * jnp.mean(x, axis=-1)
    else:
        loss = lse - picked
    loss = jnp.where(labels == ignore_index, 0.0, loss)
    if reduction == "mean":
        return jnp.sum(loss) / jnp.sum((labels != ignore_index).astype(jnp.float32))
    return loss


if __name__ == "__main__":
    key = jax.random.PRNGKey(0)
    k1, k2, k3, k4, k5, k6, k7, k8 = jax.random.split(key, 8)

    # ---- Test 1 & 2: f32 logits, whole-row path --------------------------
    N, V = 16, 256
    logits = jax.random.normal(k1, (N, V), dtype=jnp.float32)
    labels = jax.random.randint(k2, (N,), 0, V, dtype=jnp.int32)
    labels = labels.at[3].set(-100).at[10].set(-100)

    loss_mean = cross_entropy_apex(
        logits, labels, ignore_index=-100, reduction="mean", label_smoothing=0.0)
    loss_none = cross_entropy_apex(
        logits, labels, ignore_index=-100, reduction="none", label_smoothing=0.1)
    jax.block_until_ready(loss_mean)
    jax.block_until_ready(loss_none)
    assert jnp.allclose(loss_mean, _reference(logits, labels, -100, 0.0, "mean"),
                        atol=1e-5, rtol=1e-5)
    assert jnp.allclose(loss_none, _reference(logits, labels, -100, 0.1, "none"),
                        atol=1e-5, rtol=1e-5)

    # ---- Test 3: bf16 logits, ragged row grid, whole-row path ------------
    N3, V3 = 20, 512
    logits3 = jax.random.normal(k3, (N3, V3), dtype=jnp.bfloat16)
    labels3 = jax.random.randint(k4, (N3,), 0, V3, dtype=jnp.int32)
    labels3 = labels3.at[0].set(-100).at[17].set(-100)
    loss3 = cross_entropy_apex(
        logits3, labels3, ignore_index=-100, reduction="mean", label_smoothing=0.0)
    jax.block_until_ready(loss3)
    assert jnp.allclose(loss3, _reference(logits3, labels3, -100, 0.0, "mean"),
                        atol=1e-3, rtol=1e-3)

    # ---- Test 4: forced vocab-split path, f32, V divisible by chunk ------
    N4, V4 = 32, 512
    logits4 = jax.random.normal(k5, (N4, V4), dtype=jnp.float32)
    labels4 = jax.random.randint(k6, (N4,), 0, V4, dtype=jnp.int32)
    labels4 = labels4.at[5].set(-100)
    loss4 = cross_entropy_apex(
        logits4, labels4, ignore_index=-100, reduction="mean",
        label_smoothing=0.0, vocab_block=128)
    jax.block_until_ready(loss4)
    assert jnp.allclose(loss4, _reference(logits4, labels4, -100, 0.0, "mean"),
                        atol=1e-5, rtol=1e-5)

    # ---- Test 5: forced vocab-split, bf16, ragged vocab chunk + smoothing -
    N5, V5 = 24, 384
    logits5 = jax.random.normal(k7, (N5, V5), dtype=jnp.bfloat16)
    labels5 = jax.random.randint(k8, (N5,), 0, V5, dtype=jnp.int32)
    labels5 = labels5.at[2].set(-100).at[21].set(-100)
    loss5 = cross_entropy_apex(
        logits5, labels5, ignore_index=-100, reduction="none",
        label_smoothing=0.1, vocab_block=256)
    jax.block_until_ready(loss5)
    assert jnp.allclose(loss5, _reference(logits5, labels5, -100, 0.1, "none"),
                        atol=1e-3, rtol=1e-3)

    print("KERNEL_OK")
</pallas_src>

<mosaic_0001>
module attributes {stable_mosaic.version = 11 : i64} {
  func.func @_xent_rowwise_kernel(%arg0: i32, %arg1: memref<16x256xf32, #tpu.memory_space<vmem>>, %arg2: memref<16x1xi32, #tpu.memory_space<vmem>>, %arg3: memref<16x1xf32, #tpu.memory_space<vmem>>) attributes {dimension_semantics = [#tpu.dimension_semantics<parallel>], iteration_bounds = array<i64: 1>, scalar_prefetch = 0 : i64, scratch_operands = 0 : i64, tpu.core_type = #tpu.core_type<tc>, window_params = [{transform_indices = @transform_0, window_bounds = array<i64: 16, 256>}, {transform_indices = @transform_1, window_bounds = array<i64: 16, 1>}, {transform_indices = @transform_2, window_bounds = array<i64: 16, 1>}]} {
    %c0 = arith.constant 0 : index
    %c0_0 = arith.constant 0 : index
    %0 = vector.load %arg1[%c0, %c0_0] : memref<16x256xf32, #tpu.memory_space<vmem>>, vector<16x256xf32>
    %c0_1 = arith.constant 0 : index
    %c0_2 = arith.constant 0 : index
    %1 = vector.load %arg2[%c0_1, %c0_2] : memref<16x1xi32, #tpu.memory_space<vmem>>, vector<16x1xi32>
    %cst = arith.constant dense<0xFF800000> : vector<16xf32>
    %2 = vector.multi_reduction <maximumf>, %0, %cst [1] : vector<16x256xf32> to vector<16xf32>
    %3 = vector.shape_cast %2 : vector<16xf32> to vector<16x1xf32>
    %4 = vector.broadcast %3 : vector<16x1xf32> to vector<16x256xf32>
    %5 = arith.subf %0, %4 : vector<16x256xf32>
    %6 = math.exp %5 : vector<16x256xf32>
    %cst_3 = arith.constant dense<0.000000e+00> : vector<16xf32>
    %7 = vector.multi_reduction <add>, %6, %cst_3 [1] : vector<16x256xf32> to vector<16xf32>
    %8 = vector.shape_cast %7 : vector<16xf32> to vector<16x1xf32>
    %9 = math.log %8 : vector<16x1xf32>
    %10 = arith.addf %3, %9 : vector<16x1xf32>
    %11 = tpu.iota {dimensions = array<i32: 1>} : vector<16x256xi32>
    %12 = vector.broadcast %1 : vector<16x1xi32> to vector<16x256xi32>
    %13 = arith.cmpi eq, %11, %12 : vector<16x256xi32>
    %cst_4 = arith.constant 0.000000e+00 : f32
    %14 = vector.broadcast %cst_4 : f32 to vector<16x256xf32>
    %15 = arith.select %13, %0, %14 : vector<16x256xi1>, vector<16x256xf32>
    %cst_5 = arith.constant dense<0.000000e+00> : vector<16xf32>
    %16 = vector.multi_reduction <add>, %15, %cst_5 [1] : vector<16x256xf32> to vector<16xf32>
    %17 = vector.shape_cast %16 : vector<16xf32> to vector<16x1xf32>
    %18 = arith.subf %10, %17 : vector<16x1xf32>
    %c-100_i32 = arith.constant -100 : i32
    %19 = vector.broadcast %c-100_i32 : i32 to vector<16x1xi32>
    %20 = arith.cmpi eq, %1, %19 : vector<16x1xi32>
    %cst_6 = arith.constant 0.000000e+00 : f32
    %21 = vector.broadcast %cst_6 : f32 to vector<16x1xf32>
    %22 = arith.select %20, %21, %18 : vector<16x1xi1>, vector<16x1xf32>
    %c0_7 = arith.constant 0 : index
    %c0_8 = arith.constant 0 : index
    %23 = vector.load %arg3[%c0_7, %c0_8] : memref<16x1xf32, #tpu.memory_space<vmem>>, vector<16x1xf32>
    tpu.vector_store %arg3[%c0_7, %c0_8], %22 {strides = array<i32>} : memref<16x1xf32, #tpu.memory_space<vmem>>, vector<16x1xf32>,
    return
  }
  func.func @transform_0(%arg0: i32) -> (i32, i32) {
    %c0_i32 = arith.constant 0 : i32
    %c0_i32_0 = arith.constant 0 : i32
    return %arg0, %c0_i32 : i32, i32
  }
  func.func @transform_1(%arg0: i32) -> (i32, i32) {
    %c0_i32 = arith.constant 0 : i32
    %c0_i32_0 = arith.constant 0 : i32
    return %arg0, %c0_i32 : i32, i32
  }
  func.func @transform_2(%arg0: i32) -> (i32, i32) {
    %c0_i32 = arith.constant 0 : i32
    %c0_i32_0 = arith.constant 0 : i32
    return %arg0, %c0_i32 : i32, i32
  }
}

</mosaic_0001>

<llo_original>
// kernel: tpu_custom_call.1
$region0: #{tpu_custom_call.1}
  #allocation0 [shape = 'u32[]', space=smem, size = 0x4, offset = 0x4, fixed_abs, tag = 'smem constant byte address 0x4 - core index']
  #allocation1 [shape = 'u32[144,128]{1,0:T(1,128)}', space=vmem, size = 0x12000, scoped, tag = 'internal scratch']
  %s0 = inlined_call_operand.hbm [shape: f32[16,256], index: 0, kind: input, shape index: {}]
  %s1 = inlined_call_operand.vmem [shape: s32[16,1], index: 1, kind: input, shape index: {}]
  %s2 = inlined_call_operand.vmem [shape: f32[16,1], index: 2, kind: output, shape index: {}]
  %s3 = sld [smem:[#allocation0]]
  $region22: #{tpu_custom_call.1} parent=0
    _
  %s5 = ssub.s32 1, %s3
  %s6 = scalar_select 0, %s5, %s3
  $region1: #{tpu_custom_call.1} parent=0
    #allocation2 [shape = 'u8[16384]{0}', space=vmem, size = 0x4000, scoped, tag = 'input window, operand 0, single buffered']
    #allocation3 [shape = 's32[1]{0}', space=sflag, size = 0x4, scoped, tag = 'scoped memory for tpu_custom_call.1']
    %7 = vsyncpa [#allocation3], 0
    // Predicated region
    $region2: #{tpu_custom_call.1} parent=1 // pred_check
      _
    $region3: #{tpu_custom_call.1} parent=1 // pred_check_branch
      %9 = sbr.rel (0) target = $region5
    $region4: #{tpu_custom_call.1} parent=1 // pred_region
      %s11 = ssub.s32 512, 512
      %12 = vsyncadd [#allocation3], %s11
      %s13 = sshll.u32 [#allocation2], 4
      %s14 = int_to_ptr.vmem [resolvable:$true] %s13
      %19 = dma.hbm_to_vmem [thread:$0]  %s0, 512, %s14, [#allocation3], 256, 256, 16
    $region5: #{tpu_custom_call.1} parent=1 // pred_fallthru
      _
    // Predicated region
    $region6: #{tpu_custom_call.1} parent=1 // pred_check
      _
    $region7: #{tpu_custom_call.1} parent=1 // pred_check_branch
      %21 = sbr.rel (0) target = $region9
    $region8: #{tpu_custom_call.1} parent=1 // pred_region
      _
    $region9: #{tpu_custom_call.1} parent=1 // pred_fallthru
      _
    // Predicated region
    $region10: #{tpu_custom_call.1} parent=1 // pred_check
      _
    $region11: #{tpu_custom_call.1} parent=1 // pred_check_branch
      %23 = sbr.rel (0) target = $region13
    $region12: #{tpu_custom_call.1} parent=1 // pred_region
      %24 = dma.done [#allocation3], 512
    $region13: #{tpu_custom_call.1} parent=1 // pred_fallthru
      _
    %v25 = vld [vmem:[#allocation2] sm:$0xff]
    %v26 = vld [vmem:[#allocation2 + $0x8] sm:$0xff]
    %v27 = vld [vmem:[#allocation2 + $0x10] sm:$0xff]
    %v28 = vld [vmem:[#allocation2 + $0x18] sm:$0xff]
    %v29 = vld [vmem:[%s1] sm:$0xff]
    %v30 = vld [vmem:[%s1 + $0x8] sm:$0xff]
    %v31 = vmax.f32 %v25, %v26
    %32 = vmax.xlane.f32.xlu0 %v31
    %v33 = vpop.xlane.xlu0 %32
    %v34 = vmax.f32 %v27, %v28
    %35 = vmax.xlane.f32.xlu0 %v34
    %v36 = vpop.xlane.xlu0 %35
    %v37 = vsub.f32 %v25, %v33
    %v38 = vsub.f32 %v26, %v33
    %v39 = vsub.f32 %v27, %v36
    %v40 = vsub.f32 %v28, %v36
    %v41 = vmul.f32 %v37, 1.442695
    %v42 = vpow.pop %v41
    %v43 = vmul.f32 %v38, 1.442695
    %v44 = vpow.pop %v43
    %v45 = vmul.f32 %v39, 1.442695
    %v46 = vpow.pop %v45
    %v47 = vmul.f32 %v40, 1.442695
    %v48 = vpow.pop %v47
    %v49 = vadd.f32 %v42, %v44
    %50 = vadd.xlane.f32.xlu0 %v49
    %v51 = vpop.xlane.xlu0 %50
    %v52 = vadd.f32 %v46, %v48
    %53 = vadd.xlane.f32.xlu0 %v52
    %v54 = vpop.xlane.xlu0 %53
    %v55 = vlog2.pop %v51
    %v56 = vmul.f32 %v55, 0.6931472
    %v57 = vlog2.pop %v54
    %v58 = vmul.f32 %v57, 0.6931472
    %v59 = vadd.f32 %v33, %v56
    %v60 = vadd.f32 %v36, %v58
    %v61 = vlaneseq
    %v62 = vand.u32 %v61, 127
    %v63 = vadd.s32 %v62, 128
    %64 = vset.pattern.permute.xlu0 0
    %65 = vperm.xlu0 %64, %v29
    %v66 = vpop.permute.xlu0 %65
    %67 = vset.pattern.permute.xlu0 0
    %68 = vperm.xlu0 %67, %v30
    %v69 = vpop.permute.xlu0 %68
    %vm70 = vcmp.eq.s32.totalorder %v62, %v66
    %vm71 = vcmp.eq.s32.totalorder %v63, %v66
    %vm72 = vcmp.eq.s32.totalorder %v62, %v69
    %vm73 = vcmp.eq.s32.totalorder %v63, %v69
    %v74 = vsel %vm70, %v25, 0.0
    %v75 = vsel %vm71, %v26, 0.0
    %v76 = vsel %vm72, %v27, 0.0
    %v77 = vsel %vm73, %v28, 0.0
    %v78 = vadd.f32 %v74, %v75
    %79 = vadd.xlane.f32.xlu0 %v78
    %v80 = vpop.xlane.xlu0 %79
    %v81 = vadd.f32 %v76, %v77
    %82 = vadd.xlane.f32.xlu0 %v81
    %v83 = vpop.xlane.xlu0 %82
    %v84 = vsub.f32 %v59, %v80
    %v85 = vsub.f32 %v60, %v83
    %vm86 = vcmp.eq.s32.totalorder %v29, 4294967196
    %vm87 = vcmp.eq.s32.totalorder %v30, 4294967196
    %v88 = vsel %vm86, 0.0, %v84
    %v89 = vsel %vm87, 0.0, %v85
    %vm90 = vcmask 7168
    %91 = vst.msk [vmem:[%s2] sm:$0xff] %vm90, %v88
    %92 = vst.msk [vmem:[%s2 + $0x8] sm:$0xff] %vm90, %v89
    // Predicated region
    $region14: #{tpu_custom_call.1} parent=1 // pred_check
      _
    $region15: #{tpu_custom_call.1} parent=1 // pred_check_branch
      %94 = sbr.rel (0) target = $region17
    $region16: #{tpu_custom_call.1} parent=1 // pred_region
      _
    $region17: #{tpu_custom_call.1} parent=1 // pred_fallthru
      _
    // Predicated region
    $region18: #{tpu_custom_call.1} parent=1 // pred_check
      _
    $region19: #{tpu_custom_call.1} parent=1 // pred_check_branch
      %96 = sbr.rel (0) target = $region21
    $region20: #{tpu_custom_call.1} parent=1 // pred_region
      _
    $region21: #{tpu_custom_call.1} parent=1 // pred_fallthru
      _
    %97 = vsyncpa [#allocation3], 1

</llo_original>
